<compile_context>
chip_gen: v7x
topology: tpu7x:2x2x1
jax: 0.10.0
libtpu: 0.0.40
codegen_flags: <defaults>
</compile_context>

<pallas_src>
import jax
import jax.numpy as jnp
from jax import lax
from jax.experimental import pallas as pl
from jax.experimental.pallas import tpu as pltpu

BN_EPS = 1e-5


def fc_block_kernel(x_ref, w_ref, gb_ref, o_ref):
    """One (N, tn) output tile: Linear (NT matmul) -> train-mode BN -> ReLU."""
    x = x_ref[...]                        # (N, Din)  bf16 (or f32)
    w = w_ref[...]                        # (tn, Din) bf16 (or f32), PyTorch layout

    # Linear on the MXU: contract the shared Din axis (no transpose is
    # materialized); bf16-in / f32-acc fast path when operands are bf16.
    y = lax.dot_general(
        x, w,
        dimension_numbers=(((1,), (1,)), ((), ())),
        preferred_element_type=jnp.float32,
    )                                                     # (N, tn) f32

    # NOTE: the Linear bias is intentionally NOT added -- train-mode BN subtracts
    # the batch mean, so a per-feature bias cancels exactly in the output.

    # BatchNorm1d training-mode statistics, single pass (sum + sum-of-squares),
    # all in f32 (v5e has no bf16 VPU/EUP, so keep the epilogue f32 everywhere).
    n = y.shape[0]
    inv_n = jnp.float32(1.0 / n)
    mean = jnp.sum(y, axis=0, keepdims=True) * inv_n                  # (1, tn)
    sumsq = jnp.sum(y * y, axis=0, keepdims=True)                     # (1, tn)
    var = jnp.maximum(sumsq * inv_n - mean * mean, 0.0)               # biased var
    inv_std = lax.rsqrt(var + jnp.float32(BN_EPS))                    # EUP

    # Fold BN affine into one scale + one shift (cheap (1, tn) ops) so the
    # (N, tn) tail is a single multiply-add + ReLU.
    gamma = gb_ref[0:1, :]                                            # (1, tn) f32
    beta = gb_ref[1:2, :]                                             # (1, tn) f32
    scale = inv_std * gamma
    shift = beta - mean * scale
    o_ref[...] = jnp.maximum(y * scale + shift, 0.0).astype(o_ref.dtype)


def _pick_tn(dout, tn_max):
    """Largest lane-dense Dout tile <= tn_max that divides Dout."""
    if dout <= tn_max:
        return dout                      # single program: no per-step overhead
    for cand in (tn_max, 512, 384, 256, 128):
        if cand <= tn_max and dout % cand == 0:
            return cand
    # TODO(synk): pad Dout to a multiple of 128 instead of one giant masked block.
    return dout


def fc_block_forward(x, weight, bias, gamma, beta, *, tn=512,
                     matmul_dtype=jnp.bfloat16):
    """Fused Linear -> BatchNorm1d(train) -> ReLU.

    x:      (N, in_planes)
    weight: (out_planes, in_planes)  -- PyTorch nn.Linear layout (no transpose).
    bias:   (out_planes,)            -- accepted for API parity; mathematically
                                        cancelled by train-mode BN, so unused.
    gamma/beta: (out_planes,)        -- BN affine parameters.
    """
    del bias  # exactly cancelled by the batch-mean subtraction of train-mode BN
    N, Din = x.shape
    Dout = weight.shape[0]
    out_dtype = x.dtype                  # output dtype follows the input dtype

    tn = _pick_tn(Dout, tn)
    grid = (Dout // tn,)

    # bf16 operands -> native MXU fast path (f32 accumulation in-kernel) and
    # half the x/w DMA bytes.  The BN epilogue stays f32.
    xm = x.astype(matmul_dtype)
    wm = weight.astype(matmul_dtype)
    # Pack gamma/beta into one (2, Dout) f32 array -> a single per-step DMA.
    gb = jnp.stack([gamma, beta]).astype(jnp.float32)

    # VMEM budget: x resident once (single-buffered), weight / gb / out
    # double-buffered by the pipeline, plus headroom for compiler scratch.
    est = (N * Din * xm.dtype.itemsize
           + 2 * tn * Din * wm.dtype.itemsize
           + 2 * 2 * tn * 4
           + 2 * N * tn * jnp.dtype(out_dtype).itemsize
           + (4 << 20))
    # TODO(synk): on v7x (64 MiB physical VMEM) keep this well under 64 MiB; for
    #             very large N*Din switch to the Din(K)-tiled accumulator plan.
    vmem_limit = int(min(max(est, 32 << 20), 100 << 20))

    def build_call(x_spec):
        return pl.pallas_call(
            fc_block_kernel,
            out_shape=jax.ShapeDtypeStruct((N, Dout), out_dtype),
            grid=grid,
            in_specs=[
                x_spec,                                        # whole batch
                pl.BlockSpec((tn, Din), lambda j: (j, 0)),     # weight tile
                pl.BlockSpec((2, tn), lambda j: (0, j)),       # [gamma; beta]
            ],
            out_specs=pl.BlockSpec((N, tn), lambda j: (0, j)),
            compiler_params=pltpu.CompilerParams(
                dimension_semantics=("parallel",),
                vmem_limit_bytes=vmem_limit,
            ),
        )(xm, wm, gb)

    try:
        # x's block never changes across the grid -> single-buffer it so the
        # whole-batch block is not reserved twice in VMEM.
        return build_call(
            pl.BlockSpec((N, Din), lambda j: (0, 0),
                         pipeline_mode=pl.Buffered(1)))
    except Exception:
        # Fallback if single-buffering via pipeline_mode is unsupported:
        # default double-buffering (correct, slightly more VMEM).
        return build_call(pl.BlockSpec((N, Din), lambda j: (0, 0)))


if __name__ == "__main__":
    # Small shapes consistent with the module: batch=8, in_planes=32,
    # out_planes=256 (one lane-dense 256-wide tile -> grid=(1,): no per-step
    # pipeline overhead for this toy size).
    N, IN_PLANES, OUT_PLANES = 8, 32, 256

    key = jax.random.PRNGKey(0)
    kx, kw, kb = jax.random.split(key, 3)

    x = jax.random.normal(kx, (N, IN_PLANES), dtype=jnp.float32)

    # nn.Linear default init (uniform +-1/sqrt(in_planes)); BN gamma=1, beta=0.
    bound = 1.0 / (IN_PLANES ** 0.5)
    weight = jax.random.uniform(kw, (OUT_PLANES, IN_PLANES),
                                minval=-bound, maxval=bound, dtype=jnp.float32)
    bias = jax.random.uniform(kb, (OUT_PLANES,),
                              minval=-bound, maxval=bound, dtype=jnp.float32)
    gamma = jnp.ones((OUT_PLANES,), dtype=jnp.float32)
    beta = jnp.zeros((OUT_PLANES,), dtype=jnp.float32)

    out = fc_block_forward(x, weight, bias, gamma, beta)
    jax.block_until_ready(out)

    # Plain-JAX reference: same matmul precision (bf16-in / f32-acc) and true
    # training-mode BN semantics (bias included -- it cancels in the output).
    y_ref = jnp.dot(x.astype(jnp.bfloat16), weight.astype(jnp.bfloat16).T,
                    preferred_element_type=jnp.float32) + bias
    mean = y_ref.mean(axis=0, keepdims=True)
    var = ((y_ref - mean) ** 2).mean(axis=0, keepdims=True)
    ref = jnp.maximum((y_ref - mean) / jnp.sqrt(var + BN_EPS) * gamma + beta, 0.0)

    assert out.shape == ref.shape and out.dtype == ref.dtype
    assert jnp.allclose(out, ref, atol=1e-3, rtol=1e-3), \
        float(jnp.max(jnp.abs(out - ref)))

    print("KERNEL_OK")
</pallas_src>

<mosaic_0001>
module attributes {stable_mosaic.version = 11 : i64} {
  func.func @fc_block_kernel(%arg0: i32, %arg1: memref<8x32xbf16, #tpu.memory_space<vmem>>, %arg2: memref<256x32xbf16, #tpu.memory_space<vmem>>, %arg3: memref<2x256xf32, #tpu.memory_space<vmem>>, %arg4: memref<8x256xf32, #tpu.memory_space<vmem>>) attributes {dimension_semantics = [#tpu.dimension_semantics<parallel>], iteration_bounds = array<i64: 1>, scalar_prefetch = 0 : i64, scratch_operands = 0 : i64, tpu.core_type = #tpu.core_type<tc>, window_params = [{pipeline_mode = #tpu.pipeline_mode<synchronous>, transform_indices = @transform_0, window_bounds = array<i64: 8, 32>}, {transform_indices = @transform_1, window_bounds = array<i64: 256, 32>}, {transform_indices = @transform_2, window_bounds = array<i64: 2, 256>}, {transform_indices = @transform_3, window_bounds = array<i64: 8, 256>}]} {
    %c0 = arith.constant 0 : index
    %c0_0 = arith.constant 0 : index
    %0 = vector.load %arg1[%c0, %c0_0] : memref<8x32xbf16, #tpu.memory_space<vmem>>, vector<8x32xbf16>
    %c0_1 = arith.constant 0 : index
    %c0_2 = arith.constant 0 : index
    %1 = vector.load %arg2[%c0_1, %c0_2] : memref<256x32xbf16, #tpu.memory_space<vmem>>, vector<256x32xbf16>
    %cst = arith.constant dense<0.000000e+00> : vector<8x256xf32>
    %2 = tpu.matmul %0, %1, %cst {dimension_numbers = #tpu.dot_dimension_numbers<[1], [1], [0], [0], [0, 0, 1, 0], [], []>} : vector<8x32xbf16>, vector<256x32xbf16>, vector<8x256xf32> -> vector<8x256xf32>
    %cst_3 = arith.constant dense<0.000000e+00> : vector<256xf32>
    %3 = vector.multi_reduction <add>, %2, %cst_3 [0] : vector<8x256xf32> to vector<256xf32>
    %4 = vector.shape_cast %3 : vector<256xf32> to vector<1x256xf32>
    %cst_4 = arith.constant 1.250000e-01 : f32
    %5 = vector.broadcast %cst_4 : f32 to vector<1x256xf32>
    %6 = arith.mulf %4, %5 : vector<1x256xf32>
    %7 = arith.mulf %2, %2 : vector<8x256xf32>
    %cst_5 = arith.constant dense<0.000000e+00> : vector<256xf32>
    %8 = vector.multi_reduction <add>, %7, %cst_5 [0] : vector<8x256xf32> to vector<256xf32>
    %9 = vector.shape_cast %8 : vector<256xf32> to vector<1x256xf32>
    %cst_6 = arith.constant 1.250000e-01 : f32
    %10 = vector.broadcast %cst_6 : f32 to vector<1x256xf32>
    %11 = arith.mulf %9, %10 : vector<1x256xf32>
    %12 = arith.mulf %6, %6 : vector<1x256xf32>
    %13 = arith.subf %11, %12 : vector<1x256xf32>
    %cst_7 = arith.constant 0.000000e+00 : f32
    %14 = vector.broadcast %cst_7 : f32 to vector<1x256xf32>
    %15 = arith.maximumf %13, %14 : vector<1x256xf32>
    %cst_8 = arith.constant 9.99999974E-6 : f32
    %16 = vector.broadcast %cst_8 : f32 to vector<1x256xf32>
    %17 = arith.addf %15, %16 : vector<1x256xf32>
    %18 = math.rsqrt %17 : vector<1x256xf32>
    %c0_9 = arith.constant 0 : index
    %c0_10 = arith.constant 0 : index
    %19 = vector.load %arg3[%c0_9, %c0_10] : memref<2x256xf32, #tpu.memory_space<vmem>>, vector<1x256xf32>
    %c1 = arith.constant 1 : index
    %c0_11 = arith.constant 0 : index
    %20 = vector.load %arg3[%c1, %c0_11] : memref<2x256xf32, #tpu.memory_space<vmem>>, vector<1x256xf32>
    %21 = arith.mulf %18, %19 : vector<1x256xf32>
    %22 = arith.mulf %6, %21 : vector<1x256xf32>
    %23 = arith.subf %20, %22 : vector<1x256xf32>
    %24 = vector.broadcast %21 : vector<1x256xf32> to vector<8x256xf32>
    %25 = arith.mulf %2, %24 : vector<8x256xf32>
    %26 = vector.broadcast %23 : vector<1x256xf32> to vector<8x256xf32>
    %27 = arith.addf %25, %26 : vector<8x256xf32>
    %cst_12 = arith.constant 0.000000e+00 : f32
    %28 = vector.broadcast %cst_12 : f32 to vector<8x256xf32>
    %29 = arith.maximumf %27, %28 : vector<8x256xf32>
    %c0_13 = arith.constant 0 : index
    %c0_14 = arith.constant 0 : index
    %30 = vector.load %arg4[%c0_13, %c0_14] : memref<8x256xf32, #tpu.memory_space<vmem>>, vector<8x256xf32>
    tpu.vector_store %arg4[%c0_13, %c0_14], %29 {strides = array<i32>} : memref<8x256xf32, #tpu.memory_space<vmem>>, vector<8x256xf32>,
    return
  }
  func.func @transform_0(%arg0: i32) -> (i32, i32) {
    %c0_i32 = arith.constant 0 : i32
    %c0_i32_0 = arith.constant 0 : i32
    %c0_i32_1 = arith.constant 0 : i32
    return %c0_i32, %c0_i32_0 : i32, i32
  }
  func.func @transform_1(%arg0: i32) -> (i32, i32) {
    %c0_i32 = arith.constant 0 : i32
    %c0_i32_0 = arith.constant 0 : i32
    return %arg0, %c0_i32 : i32, i32
  }
  func.func @transform_2(%arg0: i32) -> (i32, i32) {
    %c0_i32 = arith.constant 0 : i32
    %c0_i32_0 = arith.constant 0 : i32
    return %c0_i32, %arg0 : i32, i32
  }
  func.func @transform_3(%arg0: i32) -> (i32, i32) {
    %c0_i32 = arith.constant 0 : i32
    %c0_i32_0 = arith.constant 0 : i32
    return %c0_i32, %arg0 : i32, i32
  }
}

module attributes {stable_mosaic.version = 11 : i64} {
  func.func @fc_block_kernel(%arg0: i32, %arg1: memref<8x32xbf16, #tpu.memory_space<vmem>>, %arg2: memref<256x32xbf16, #tpu.memory_space<vmem>>, %arg3: memref<2x256xf32, #tpu.memory_space<vmem>>, %arg4: memref<8x256xf32, #tpu.memory_space<vmem>>) attributes {dimension_semantics = [#tpu.dimension_semantics<parallel>], iteration_bounds = array<i64: 1>, scalar_prefetch = 0 : i64, scratch_operands = 0 : i64, tpu.core_type = #tpu.core_type<tc>, window_params = [{pipeline_mode = #tpu.pipeline_mode<synchronous>, transform_indices = @transform_0, window_bounds = array<i64: 8, 32>}, {transform_indices = @transform_1, window_bounds = array<i64: 256, 32>}, {transform_indices = @transform_2, window_bounds = array<i64: 2, 256>}, {transform_indices = @transform_3, window_bounds = array<i64: 8, 256>}]} {
    %c0 = arith.constant 0 : index
    %c0_0 = arith.constant 0 : index
    %0 = vector.load %arg1[%c0, %c0_0] : memref<8x32xbf16, #tpu.memory_space<vmem>>, vector<8x32xbf16>
    %c0_1 = arith.constant 0 : index
    %c0_2 = arith.constant 0 : index
    %1 = vector.load %arg2[%c0_1, %c0_2] : memref<256x32xbf16, #tpu.memory_space<vmem>>, vector<256x32xbf16>
    %cst = arith.constant dense<0.000000e+00> : vector<8x256xf32>
    %2 = tpu.matmul %0, %1, %cst {dimension_numbers = #tpu.dot_dimension_numbers<[1], [1], [0], [0], [0, 0, 1, 0], [], []>} : vector<8x32xbf16>, vector<256x32xbf16>, vector<8x256xf32> -> vector<8x256xf32>
    %cst_3 = arith.constant dense<0.000000e+00> : vector<256xf32>
    %3 = vector.multi_reduction <add>, %2, %cst_3 [0] : vector<8x256xf32> to vector<256xf32>
    %4 = vector.shape_cast %3 : vector<256xf32> to vector<1x256xf32>
    %cst_4 = arith.constant 1.250000e-01 : f32
    %5 = vector.broadcast %cst_4 : f32 to vector<1x256xf32>
    %6 = arith.mulf %4, %5 : vector<1x256xf32>
    %7 = arith.mulf %2, %2 : vector<8x256xf32>
    %cst_5 = arith.constant dense<0.000000e+00> : vector<256xf32>
    %8 = vector.multi_reduction <add>, %7, %cst_5 [0] : vector<8x256xf32> to vector<256xf32>
    %9 = vector.shape_cast %8 : vector<256xf32> to vector<1x256xf32>
    %cst_6 = arith.constant 1.250000e-01 : f32
    %10 = vector.broadcast %cst_6 : f32 to vector<1x256xf32>
    %11 = arith.mulf %9, %10 : vector<1x256xf32>
    %12 = arith.mulf %6, %6 : vector<1x256xf32>
    %13 = arith.subf %11, %12 : vector<1x256xf32>
    %cst_7 = arith.constant 0.000000e+00 : f32
    %14 = vector.broadcast %cst_7 : f32 to vector<1x256xf32>
    %15 = arith.maximumf %13, %14 : vector<1x256xf32>
    %cst_8 = arith.constant 9.99999974E-6 : f32
    %16 = vector.broadcast %cst_8 : f32 to vector<1x256xf32>
    %17 = arith.addf %15, %16 : vector<1x256xf32>
    %18 = math.rsqrt %17 : vector<1x256xf32>
    %c0_9 = arith.constant 0 : index
    %c0_10 = arith.constant 0 : index
    %19 = vector.load %arg3[%c0_9, %c0_10] : memref<2x256xf32, #tpu.memory_space<vmem>>, vector<1x256xf32>
    %c1 = arith.constant 1 : index
    %c0_11 = arith.constant 0 : index
    %20 = vector.load %arg3[%c1, %c0_11] : memref<2x256xf32, #tpu.memory_space<vmem>>, vector<1x256xf32>
    %21 = arith.mulf %18, %19 : vector<1x256xf32>
    %22 = arith.mulf %6, %21 : vector<1x256xf32>
    %23 = arith.subf %20, %22 : vector<1x256xf32>
    %24 = vector.broadcast %21 : vector<1x256xf32> to vector<8x256xf32>
    %25 = arith.mulf %2, %24 : vector<8x256xf32>
    %26 = vector.broadcast %23 : vector<1x256xf32> to vector<8x256xf32>
    %27 = arith.addf %25, %26 : vector<8x256xf32>
    %cst_12 = arith.constant 0.000000e+00 : f32
    %28 = vector.broadcast %cst_12 : f32 to vector<8x256xf32>
    %29 = arith.maximumf %27, %28 : vector<8x256xf32>
    %c0_13 = arith.constant 0 : index
    %c0_14 = arith.constant 0 : index
    %30 = vector.load %arg4[%c0_13, %c0_14] : memref<8x256xf32, #tpu.memory_space<vmem>>, vector<8x256xf32>
    tpu.vector_store %arg4[%c0_13, %c0_14], %29 {strides = array<i32>} : memref<8x256xf32, #tpu.memory_space<vmem>>, vector<8x256xf32>,
    return
  }
  func.func @transform_0(%arg0: i32) -> (i32, i32) {
    %c0_i32 = arith.constant 0 : i32
    %c0_i32_0 = arith.constant 0 : i32
    %c0_i32_1 = arith.constant 0 : i32
    return %c0_i32, %c0_i32_0 : i32, i32
  }
  func.func @transform_1(%arg0: i32) -> (i32, i32) {
    %c0_i32 = arith.constant 0 : i32
    %c0_i32_0 = arith.constant 0 : i32
    return %arg0, %c0_i32 : i32, i32
  }
  func.func @transform_2(%arg0: i32) -> (i32, i32) {
    %c0_i32 = arith.constant 0 : i32
    %c0_i32_0 = arith.constant 0 : i32
    return %c0_i32, %arg0 : i32, i32
  }
  func.func @transform_3(%arg0: i32) -> (i32, i32) {
    %c0_i32 = arith.constant 0 : i32
    %c0_i32_0 = arith.constant 0 : i32
    return %c0_i32, %arg0 : i32, i32
  }
}

</mosaic_0001>

<llo_original>
// kernel: tpu_custom_call.1
$region0: #{tpu_custom_call.1}
  #allocation0 [shape = 'u32[]', space=smem, size = 0x4, offset = 0x4, fixed_abs, tag = 'smem constant byte address 0x4 - core index']
  #allocation1 [shape = 'u32[144,128]{1,0:T(1,128)}', space=vmem, size = 0x12000, scoped, tag = 'internal scratch']
  %s0 = inlined_call_operand.vmem [shape: bf16[8,32], index: 0, kind: input, shape index: {}]
  %s1 = inlined_call_operand.vmem [shape: bf16[256,32], index: 1, kind: input, shape index: {}]
  %s2 = inlined_call_operand.vmem [shape: f32[2,256], index: 2, kind: input, shape index: {}]
  %s3 = inlined_call_operand.hbm [shape: f32[8,256], index: 3, kind: output, shape index: {}]
  %s4 = sld [smem:[#allocation0]]
  $region22: #{tpu_custom_call.1} parent=0
    _
  %s6 = ssub.s32 1, %s4
  %s7 = scalar_select 0, %s6, %s4
  $region1: #{tpu_custom_call.1} parent=0
    #allocation2 [shape = 'u8[8192]{0}', space=vmem, size = 0x2000, scoped, tag = 'output window, operand 0, single buffered']
    #allocation3 [shape = 's32[1]{0}', space=sflag, size = 0x4, scoped, tag = 'scoped memory for tpu_custom_call.1']
    %8 = vsyncpa [#allocation3], 0
    // Predicated region
    $region2: #{tpu_custom_call.1} parent=1 // pred_check
      _
    $region3: #{tpu_custom_call.1} parent=1 // pred_check_branch
      %10 = sbr.rel (0) target = $region5
    $region4: #{tpu_custom_call.1} parent=1 // pred_region
      _
    $region5: #{tpu_custom_call.1} parent=1 // pred_fallthru
      _
    // Predicated region
    $region6: #{tpu_custom_call.1} parent=1 // pred_check
      _
    $region7: #{tpu_custom_call.1} parent=1 // pred_check_branch
      %12 = sbr.rel (0) target = $region9
    $region8: #{tpu_custom_call.1} parent=1 // pred_region
      _
    $region9: #{tpu_custom_call.1} parent=1 // pred_fallthru
      _
    // Predicated region
    $region10: #{tpu_custom_call.1} parent=1 // pred_check
      _
    $region11: #{tpu_custom_call.1} parent=1 // pred_check_branch
      %14 = sbr.rel (0) target = $region13
    $region12: #{tpu_custom_call.1} parent=1 // pred_region
      _
    $region13: #{tpu_custom_call.1} parent=1 // pred_fallthru
      _
    %v16 = vld [vmem:[%s0] sm:$0xf]
    %v17 = vld [vmem:[%s1] sm:$0xf]
    %v18 = vld [vmem:[%s1 + $0x4] sm:$0xf]
    %v19 = vld [vmem:[%s1 + $0x8] sm:$0xf]
    %v20 = vld [vmem:[%s1 + $0xc] sm:$0xf]
    %v21 = vld [vmem:[%s1 + $0x10] sm:$0xf]
    %v22 = vld [vmem:[%s1 + $0x14] sm:$0xf]
    %v23 = vld [vmem:[%s1 + $0x18] sm:$0xf]
    %v24 = vld [vmem:[%s1 + $0x1c] sm:$0xf]
    %v25 = vld [vmem:[%s1 + $0x20] sm:$0xf]
    %v26 = vld [vmem:[%s1 + $0x24] sm:$0xf]
    %v27 = vld [vmem:[%s1 + $0x28] sm:$0xf]
    %v28 = vld [vmem:[%s1 + $0x2c] sm:$0xf]
    %v29 = vld [vmem:[%s1 + $0x30] sm:$0xf]
    %v30 = vld [vmem:[%s1 + $0x34] sm:$0xf]
    %v31 = vld [vmem:[%s1 + $0x38] sm:$0xf]
    %v32 = vld [vmem:[%s1 + $0x3c] sm:$0xf]
    %v33 = vld [vmem:[%s1 + $0x40] sm:$0xf]
    %v34 = vld [vmem:[%s1 + $0x44] sm:$0xf]
    %v35 = vld [vmem:[%s1 + $0x48] sm:$0xf]
    %v36 = vld [vmem:[%s1 + $0x4c] sm:$0xf]
    %v37 = vld [vmem:[%s1 + $0x50] sm:$0xf]
    %v38 = vld [vmem:[%s1 + $0x54] sm:$0xf]
    %v39 = vld [vmem:[%s1 + $0x58] sm:$0xf]
    %v40 = vld [vmem:[%s1 + $0x5c] sm:$0xf]
    %v41 = vld [vmem:[%s1 + $0x60] sm:$0xf]
    %v42 = vld [vmem:[%s1 + $0x64] sm:$0xf]
    %v43 = vld [vmem:[%s1 + $0x68] sm:$0xf]
    %v44 = vld [vmem:[%s1 + $0x6c] sm:$0xf]
    %v45 = vld [vmem:[%s1 + $0x70] sm:$0xf]
    %v46 = vld [vmem:[%s1 + $0x74] sm:$0xf]
    %v47 = vld [vmem:[%s1 + $0x78] sm:$0xf]
    %v48 = vld [vmem:[%s1 + $0x7c] sm:$0xf]
    %v81 = vunpack.c.l.b16 %v17
    %v82 = vunpack.c.l.b16 %v18
    %v83 = vunpack.c.l.b16 %v19
    %v84 = vunpack.c.l.b16 %v20
    %v85 = vunpack.c.l.b16 %v21
    %v86 = vunpack.c.l.b16 %v22
    %v87 = vunpack.c.l.b16 %v23
    %v88 = vunpack.c.l.b16 %v24
    %v89 = vunpack.c.l.b16 %v25
    %v90 = vunpack.c.l.b16 %v26
    %v91 = vunpack.c.l.b16 %v27
    %v92 = vunpack.c.l.b16 %v28
    %v93 = vunpack.c.l.b16 %v29
    %v94 = vunpack.c.l.b16 %v30
    %v95 = vunpack.c.l.b16 %v31
    %v96 = vunpack.c.l.b16 %v32
    %v97 = vunpack.c.l.b16 %v33
    %v98 = vunpack.c.l.b16 %v34
    %v99 = vunpack.c.l.b16 %v35
    %v100 = vunpack.c.l.b16 %v36
    %v101 = vunpack.c.l.b16 %v37
    %v102 = vunpack.c.l.b16 %v38
    %v103 = vunpack.c.l.b16 %v39
    %v104 = vunpack.c.l.b16 %v40
    %v105 = vunpack.c.l.b16 %v41
    %v106 = vunpack.c.l.b16 %v42
    %v107 = vunpack.c.l.b16 %v43
    %v108 = vunpack.c.l.b16 %v44
    %v109 = vunpack.c.l.b16 %v45
    %v110 = vunpack.c.l.b16 %v46
    %v111 = vunpack.c.l.b16 %v47
    %v112 = vunpack.c.l.b16 %v48
    %v113 = vpack.c.b16 %v82, %v81
    %v114 = vpack.c.b16 %v84, %v83
    %v115 = vpack.c.b16 %v86, %v85
    %v116 = vpack.c.b16 %v88, %v87
    %v117 = vpack.c.b16 %v90, %v89
    %v118 = vpack.c.b16 %v92, %v91
    %v119 = vpack.c.b16 %v94, %v93
    %v120 = vpack.c.b16 %v96, %v95
    %v121 = vpack.c.b16 %v98, %v97
    %v122 = vpack.c.b16 %v100, %v99
    %v123 = vpack.c.b16 %v102, %v101
    %v124 = vpack.c.b16 %v104, %v103
    %v125 = vpack.c.b16 %v106, %v105
    %v126 = vpack.c.b16 %v108, %v107
    %v127 = vpack.c.b16 %v110, %v109
    %v128 = vpack.c.b16 %v112, %v111
    %vm129 = vcmask 261120
    %v131 = vsel %vm129, %v16, 0
    %v134 = vsel %vm129, %v113, 0
    %v137 = vsel %vm129, %v114, 0
    %v140 = vsel %vm129, %v115, 0
    %v143 = vsel %vm129, %v116, 0
    %v146 = vsel %vm129, %v117, 0
    %v149 = vsel %vm129, %v118, 0
    %v152 = vsel %vm129, %v119, 0
    %v155 = vsel %vm129, %v120, 0
    %v158 = vsel %vm129, %v121, 0
    %v161 = vsel %vm129, %v122, 0
    %v164 = vsel %vm129, %v123, 0
    %v167 = vsel %vm129, %v124, 0
    %v170 = vsel %vm129, %v125, 0
    %v173 = vsel %vm129, %v126, 0
    %v176 = vsel %vm129, %v127, 0
    %v179 = vsel %vm129, %v128, 0
    %181 = vmatprep.subr.bf16.mxu0 0
    %182 = vmatpush1.bf16.xpose.msra.mxu0 %v134
    %183 = vmatprep.subr.bf16.mxu0 0
    %184 = vmatpush1.bf16.xpose.msra.mxu0 %v137
    %185 = vmatprep.subr.bf16.mxu0 0
    %186 = vmatpush1.bf16.xpose.msra.mxu0 %v140
    %187 = vmatprep.subr.bf16.mxu0 0
    %188 = vmatpush1.bf16.xpose.msra.mxu0 %v143
    %189 = vmatprep.subr.bf16.mxu0 0
    %190 = vmatpush1.bf16.xpose.msra.mxu0 %v146
    %191 = vmatprep.subr.bf16.mxu0 0
    %192 = vmatpush1.bf16.xpose.msra.mxu0 %v149
    %193 = vmatprep.subr.bf16.mxu0 0
    %194 = vmatpush1.bf16.xpose.msra.mxu0 %v152
    %195 = vmatprep.subr.bf16.mxu0 0
    %196 = vmatpush1.bf16.xpose.msra.mxu0 %v155
    %197 = vmatprep.subr.bf16.mxu0 0
    %198 = vmatpush1.bf16.xpose.msra.mxu0 %v158
    %199 = vmatprep.subr.bf16.mxu0 0
    %200 = vmatpush1.bf16.xpose.msra.mxu0 %v161
    %201 = vmatprep.subr.bf16.mxu0 0
    %202 = vmatpush1.bf16.xpose.msra.mxu0 %v164
    %203 = vmatprep.subr.bf16.mxu0 0
    %204 = vmatpush1.bf16.xpose.msra.mxu0 %v167
    %205 = vmatprep.subr.bf16.mxu0 0
    %206 = vmatpush1.bf16.xpose.msra.mxu0 %v170
    %207 = vmatprep.subr.bf16.mxu0 0
    %208 = vmatpush1.bf16.xpose.msra.mxu0 %v173
    %209 = vmatprep.subr.bf16.mxu0 0
    %210 = vmatpush1.bf16.xpose.msra.mxu0 %v176
    %211 = vmatprep.subr.bf16.mxu0 0
    %212 = vmatpush1.bf16.xpose.msra.mxu0 %v179
    %213 = vmatprep.mubr.bf16.mxu0 0
    %214 = vmatmul.mubr.bf16.gmra.mrb[0].mxu0 %v131
    %v215 = vpop.f32.mrb[0].mxu0
    %v216 = vadd.f32 0.0, %v215
    %v217 = vpop.f32.mrb[0].mxu0
    %v218 = vadd.f32 0.0, %v217
    %v219 = vpop.f32.mrb[0].mxu0
    %v220 = vpop.f32.mrb[0].mxu0
    %221 = vdwg.mxu0
    %v222 = vrot.slane %v216, 4
    %v223 = vadd.f32 %v216, %v222
    %v224 = vrot.slane %v223, 2
    %v225 = vadd.f32 %v223, %v224
    %v226 = vrot.slane %v225, 1
    %v227 = vadd.f32 %v225, %v226
    %v228 = vrot.slane %v218, 4
    %v229 = vadd.f32 %v218, %v228
    %v230 = vrot.slane %v229, 2
    %v231 = vadd.f32 %v229, %v230
    %v232 = vrot.slane %v231, 1
    %v233 = vadd.f32 %v231, %v232
    %v234 = vmul.f32 %v227, 0.125
    %v235 = vmul.f32 %v233, 0.125
    %v236 = vmul.f32 %v216, %v216
    %v237 = vmul.f32 %v218, %v218
    %v238 = vrot.slane %v236, 4
    %v239 = vadd.f32 %v236, %v238
    %v240 = vrot.slane %v239, 2
    %v241 = vadd.f32 %v239, %v240
    %v242 = vrot.slane %v241, 1
    %v243 = vadd.f32 %v241, %v242
    %v244 = vrot.slane %v237, 4
    %v245 = vadd.f32 %v237, %v244
    %v246 = vrot.slane %v245, 2
    %v247 = vadd.f32 %v245, %v246
    %v248 = vrot.slane %v247, 1
    %v249 = vadd.f32 %v247, %v248
    %v250 = vmul.f32 %v243, 0.125
    %v251 = vmul.f32 %v249, 0.125
    %v252 = vmul.f32 %v234, %v234
    %v253 = vmul.f32 %v235, %v235
    %v254 = vsub.f32 %v250, %v252
    %v255 = vsub.f32 %v251, %v253
    %v256 = vmax.f32 %v254, 0.0
    %v257 = vmax.f32 %v255, 0.0
    %v258 = vadd.f32 %v256, 1e-05
    %v259 = vadd.f32 %v257, 1e-05
    %v260 = vrsqrt.pop %v258
    %v261 = vrsqrt.pop %v259
    %v262 = vld [vmem:[%s2] ss:$2 sm:$0x3]
    %s263 = scalar_lea.vmem %s2, 1
    %v264 = vld [vmem:[%s263] ss:$2 sm:$0x3]
    %v266 = vlaneseq
    %v267 = vshrl.u32 %v266, 7
    %v268 = vsub.s32 0, %v267
    %v269 = vrot.slane %v262, %v268
    %v270 = vlaneseq
    %v271 = vshrl.u32 %v270, 7
    %v272 = vsub.s32 1, %v271
    %v273 = vrot.slane %v262, %v272
    %v276 = vmul.f32 %v260, %v269
    %v277 = vmul.f32 %v261, %v273
    %v278 = vmul.f32 %v234, %v276
    %v279 = vmul.f32 %v235, %v277
    %v282 = vcombine.low %v278, %v279
    %v284 = vunpack.c.l.s4 1966171168
    %v285 = vunpack.c.0.s8 %v284
    %v286 = vlaneseq
    %v287 = vshrl.u32 %v286, 7
    %v288 = vsub.s32 %v285, %v287
    %v289 = vrot.slane %v282, %v288
    %v291 = vunpack.c.l.s4 1966171168
    %v292 = vunpack.c.0.s8 %v291
    %v293 = vlaneseq
    %v294 = vshrl.u32 %v293, 7
    %v295 = vsub.s32 %v292, %v294
    %v296 = vrot.slane %v289, %v295
    %v298 = vsub.f32 %v264, %v296
    %v299 = vlaneseq
    %v300 = vshrl.u32 %v299, 7
    %v301 = vsub.s32 0, %v300
    %v302 = vrot.slane %v276, %v301
    %v303 = vlaneseq
    %v304 = vshrl.u32 %v303, 7
    %v305 = vsub.s32 0, %v304
    %v306 = vrot.slane %v277, %v305
    %v307 = vmul.f32 %v216, %v302
    %v308 = vmul.f32 %v218, %v306
    %v310 = vlaneseq
    %v311 = vshrl.u32 %v310, 7
    %v312 = vsub.s32 0, %v311
    %v313 = vrot.slane %v298, %v312
    %v314 = vlaneseq
    %v315 = vshrl.u32 %v314, 7
    %v316 = vsub.s32 1, %v315
    %v317 = vrot.slane %v298, %v316
    %v320 = vadd.f32 %v307, %v313
    %v321 = vadd.f32 %v308, %v317
    %v322 = vmax.f32 %v320, 0.0
    %v323 = vmax.f32 %v321, 0.0
    %324 = vst [vmem:[#allocation2] sm:$0xff] %v322
    %325 = vst [vmem:[#allocation2 + $0x8] sm:$0xff] %v323
    // Predicated region
    $region14: #{tpu_custom_call.1} parent=1 // pred_check
      _
    $region15: #{tpu_custom_call.1} parent=1 // pred_check_branch
      %327 = sbr.rel (0) target = $region17
    $region16: #{tpu_custom_call.1} parent=1 // pred_region
      %s329 = ssub.s32 256, 256
      %330 = vsyncadd [#allocation3], %s329
      %s332 = sshll.u32 [#allocation2], 4
      %s333 = int_to_ptr.vmem [resolvable:$true] %s332
      %335 = dma.vmem_to_hbm [thread:$0]  %s333, 256, %s3, [#allocation3]
    $region17: #{tpu_custom_call.1} parent=1 // pred_fallthru
      _
    // Predicated region
    $region18: #{tpu_custom_call.1} parent=1 // pred_check
      _
    $region19: #{tpu_custom_call.1} parent=1 // pred_check_branch
      %337 = sbr.rel (0) target = $region21
    $region20: #{tpu_custom_call.1} parent=1 // pred_region
      %338 = dma.done [#allocation3], 256
    $region21: #{tpu_custom_call.1} parent=1 // pred_fallthru
      _
    %339 = vsyncpa [#allocation3], 1

// kernel: tpu_custom_call.1
$region0: #{tpu_custom_call.1}
  #allocation0 [shape = 'u32[]', space=smem, size = 0x4, offset = 0x4, fixed_abs, tag = 'smem constant byte address 0x4 - core index']
  #allocation1 [shape = 'u32[144,128]{1,0:T(1,128)}', space=vmem, size = 0x12000, scoped, tag = 'internal scratch']
  %s0 = inlined_call_operand.vmem [shape: bf16[8,32], index: 0, kind: input, shape index: {}]
  %s1 = inlined_call_operand.vmem [shape: bf16[256,32], index: 1, kind: input, shape index: {}]
  %s2 = inlined_call_operand.vmem [shape: f32[2,256], index: 2, kind: input, shape index: {}]
  %s3 = inlined_call_operand.hbm [shape: f32[8,256], index: 3, kind: output, shape index: {}]
  %s4 = sld [smem:[#allocation0]]
  $region22: #{tpu_custom_call.1} parent=0
    _
  %s6 = ssub.s32 1, %s4
  %s7 = scalar_select 0, %s6, %s4
  $region1: #{tpu_custom_call.1} parent=0
    #allocation2 [shape = 'u8[8192]{0}', space=vmem, size = 0x2000, scoped, tag = 'output window, operand 0, single buffered']
    #allocation3 [shape = 's32[1]{0}', space=sflag, size = 0x4, scoped, tag = 'scoped memory for tpu_custom_call.1']
    %8 = vsyncpa [#allocation3], 0
    // Predicated region
    $region2: #{tpu_custom_call.1} parent=1 // pred_check
      _
    $region3: #{tpu_custom_call.1} parent=1 // pred_check_branch
      %10 = sbr.rel (0) target = $region5
    $region4: #{tpu_custom_call.1} parent=1 // pred_region
      _
    $region5: #{tpu_custom_call.1} parent=1 // pred_fallthru
      _
    // Predicated region
    $region6: #{tpu_custom_call.1} parent=1 // pred_check
      _
    $region7: #{tpu_custom_call.1} parent=1 // pred_check_branch
      %12 = sbr.rel (0) target = $region9
    $region8: #{tpu_custom_call.1} parent=1 // pred_region
      _
    $region9: #{tpu_custom_call.1} parent=1 // pred_fallthru
      _
    // Predicated region
    $region10: #{tpu_custom_call.1} parent=1 // pred_check
      _
    $region11: #{tpu_custom_call.1} parent=1 // pred_check_branch
      %14 = sbr.rel (0) target = $region13
    $region12: #{tpu_custom_call.1} parent=1 // pred_region
      _
    $region13: #{tpu_custom_call.1} parent=1 // pred_fallthru
      _
    %v16 = vld [vmem:[%s0] sm:$0xf]
    %v17 = vld [vmem:[%s1] sm:$0xf]
    %v18 = vld [vmem:[%s1 + $0x4] sm:$0xf]
    %v19 = vld [vmem:[%s1 + $0x8] sm:$0xf]
    %v20 = vld [vmem:[%s1 + $0xc] sm:$0xf]
    %v21 = vld [vmem:[%s1 + $0x10] sm:$0xf]
    %v22 = vld [vmem:[%s1 + $0x14] sm:$0xf]
    %v23 = vld [vmem:[%s1 + $0x18] sm:$0xf]
    %v24 = vld [vmem:[%s1 + $0x1c] sm:$0xf]
    %v25 = vld [vmem:[%s1 + $0x20] sm:$0xf]
    %v26 = vld [vmem:[%s1 + $0x24] sm:$0xf]
    %v27 = vld [vmem:[%s1 + $0x28] sm:$0xf]
    %v28 = vld [vmem:[%s1 + $0x2c] sm:$0xf]
    %v29 = vld [vmem:[%s1 + $0x30] sm:$0xf]
    %v30 = vld [vmem:[%s1 + $0x34] sm:$0xf]
    %v31 = vld [vmem:[%s1 + $0x38] sm:$0xf]
    %v32 = vld [vmem:[%s1 + $0x3c] sm:$0xf]
    %v33 = vld [vmem:[%s1 + $0x40] sm:$0xf]
    %v34 = vld [vmem:[%s1 + $0x44] sm:$0xf]
    %v35 = vld [vmem:[%s1 + $0x48] sm:$0xf]
    %v36 = vld [vmem:[%s1 + $0x4c] sm:$0xf]
    %v37 = vld [vmem:[%s1 + $0x50] sm:$0xf]
    %v38 = vld [vmem:[%s1 + $0x54] sm:$0xf]
    %v39 = vld [vmem:[%s1 + $0x58] sm:$0xf]
    %v40 = vld [vmem:[%s1 + $0x5c] sm:$0xf]
    %v41 = vld [vmem:[%s1 + $0x60] sm:$0xf]
    %v42 = vld [vmem:[%s1 + $0x64] sm:$0xf]
    %v43 = vld [vmem:[%s1 + $0x68] sm:$0xf]
    %v44 = vld [vmem:[%s1 + $0x6c] sm:$0xf]
    %v45 = vld [vmem:[%s1 + $0x70] sm:$0xf]
    %v46 = vld [vmem:[%s1 + $0x74] sm:$0xf]
    %v47 = vld [vmem:[%s1 + $0x78] sm:$0xf]
    %v48 = vld [vmem:[%s1 + $0x7c] sm:$0xf]
    %v81 = vunpack.c.l.b16 %v17
    %v82 = vunpack.c.l.b16 %v18
    %v83 = vunpack.c.l.b16 %v19
    %v84 = vunpack.c.l.b16 %v20
    %v85 = vunpack.c.l.b16 %v21
    %v86 = vunpack.c.l.b16 %v22
    %v87 = vunpack.c.l.b16 %v23
    %v88 = vunpack.c.l.b16 %v24
    %v89 = vunpack.c.l.b16 %v25
    %v90 = vunpack.c.l.b16 %v26
    %v91 = vunpack.c.l.b16 %v27
    %v92 = vunpack.c.l.b16 %v28
    %v93 = vunpack.c.l.b16 %v29
    %v94 = vunpack.c.l.b16 %v30
    %v95 = vunpack.c.l.b16 %v31
    %v96 = vunpack.c.l.b16 %v32
    %v97 = vunpack.c.l.b16 %v33
    %v98 = vunpack.c.l.b16 %v34
    %v99 = vunpack.c.l.b16 %v35
    %v100 = vunpack.c.l.b16 %v36
    %v101 = vunpack.c.l.b16 %v37
    %v102 = vunpack.c.l.b16 %v38
    %v103 = vunpack.c.l.b16 %v39
    %v104 = vunpack.c.l.b16 %v40
    %v105 = vunpack.c.l.b16 %v41
    %v106 = vunpack.c.l.b16 %v42
    %v107 = vunpack.c.l.b16 %v43
    %v108 = vunpack.c.l.b16 %v44
    %v109 = vunpack.c.l.b16 %v45
    %v110 = vunpack.c.l.b16 %v46
    %v111 = vunpack.c.l.b16 %v47
    %v112 = vunpack.c.l.b16 %v48
    %v113 = vpack.c.b16 %v82, %v81
    %v114 = vpack.c.b16 %v84, %v83
    %v115 = vpack.c.b16 %v86, %v85
    %v116 = vpack.c.b16 %v88, %v87
    %v117 = vpack.c.b16 %v90, %v89
    %v118 = vpack.c.b16 %v92, %v91
    %v119 = vpack.c.b16 %v94, %v93
    %v120 = vpack.c.b16 %v96, %v95
    %v121 = vpack.c.b16 %v98, %v97
    %v122 = vpack.c.b16 %v100, %v99
    %v123 = vpack.c.b16 %v102, %v101
    %v124 = vpack.c.b16 %v104, %v103
    %v125 = vpack.c.b16 %v106, %v105
    %v126 = vpack.c.b16 %v108, %v107
    %v127 = vpack.c.b16 %v110, %v109
    %v128 = vpack.c.b16 %v112, %v111
    %vm129 = vcmask 261120
    %v131 = vsel %vm129, %v16, 0
    %v134 = vsel %vm129, %v113, 0
    %v137 = vsel %vm129, %v114, 0
    %v140 = vsel %vm129, %v115, 0
    %v143 = vsel %vm129, %v116, 0
    %v146 = vsel %vm129, %v117, 0
    %v149 = vsel %vm129, %v118, 0
    %v152 = vsel %vm129, %v119, 0
    %v155 = vsel %vm129, %v120, 0
    %v158 = vsel %vm129, %v121, 0
    %v161 = vsel %vm129, %v122, 0
    %v164 = vsel %vm129, %v123, 0
    %v167 = vsel %vm129, %v124, 0
    %v170 = vsel %vm129, %v125, 0
    %v173 = vsel %vm129, %v126, 0
    %v176 = vsel %vm129, %v127, 0
    %v179 = vsel %vm129, %v128, 0
    %181 = vmatprep.subr.bf16.mxu0 0
    %182 = vmatpush1.bf16.xpose.msra.mxu0 %v134
    %183 = vmatprep.subr.bf16.mxu0 0
    %184 = vmatpush1.bf16.xpose.msra.mxu0 %v137
    %185 = vmatprep.subr.bf16.mxu0 0
    %186 = vmatpush1.bf16.xpose.msra.mxu0 %v140
    %187 = vmatprep.subr.bf16.mxu0 0
    %188 = vmatpush1.bf16.xpose.msra.mxu0 %v143
    %189 = vmatprep.subr.bf16.mxu0 0
    %190 = vmatpush1.bf16.xpose.msra.mxu0 %v146
    %191 = vmatprep.subr.bf16.mxu0 0
    %192 = vmatpush1.bf16.xpose.msra.mxu0 %v149
    %193 = vmatprep.subr.bf16.mxu0 0
    %194 = vmatpush1.bf16.xpose.msra.mxu0 %v152
    %195 = vmatprep.subr.bf16.mxu0 0
    %196 = vmatpush1.bf16.xpose.msra.mxu0 %v155
    %197 = vmatprep.subr.bf16.mxu0 0
    %198 = vmatpush1.bf16.xpose.msra.mxu0 %v158
    %199 = vmatprep.subr.bf16.mxu0 0
    %200 = vmatpush1.bf16.xpose.msra.mxu0 %v161
    %201 = vmatprep.subr.bf16.mxu0 0
    %202 = vmatpush1.bf16.xpose.msra.mxu0 %v164
    %203 = vmatprep.subr.bf16.mxu0 0
    %204 = vmatpush1.bf16.xpose.msra.mxu0 %v167
    %205 = vmatprep.subr.bf16.mxu0 0
    %206 = vmatpush1.bf16.xpose.msra.mxu0 %v170
    %207 = vmatprep.subr.bf16.mxu0 0
    %208 = vmatpush1.bf16.xpose.msra.mxu0 %v173
    %209 = vmatprep.subr.bf16.mxu0 0
    %210 = vmatpush1.bf16.xpose.msra.mxu0 %v176
    %211 = vmatprep.subr.bf16.mxu0 0
    %212 = vmatpush1.bf16.xpose.msra.mxu0 %v179
    %213 = vmatprep.mubr.bf16.mxu0 0
    %214 = vmatmul.mubr.bf16.gmra.mrb[0].mxu0 %v131
    %v215 = vpop.f32.mrb[0].mxu0
    %v216 = vadd.f32 0.0, %v215
    %v217 = vpop.f32.mrb[0].mxu0
    %v218 = vadd.f32 0.0, %v217
    %v219 = vpop.f32.mrb[0].mxu0
    %v220 = vpop.f32.mrb[0].mxu0
    %221 = vdwg.mxu0
    %v222 = vrot.slane %v216, 4
    %v223 = vadd.f32 %v216, %v222
    %v224 = vrot.slane %v223, 2
    %v225 = vadd.f32 %v223, %v224
    %v226 = vrot.slane %v225, 1
    %v227 = vadd.f32 %v225, %v226
    %v228 = vrot.slane %v218, 4
    %v229 = vadd.f32 %v218, %v228
    %v230 = vrot.slane %v229, 2
    %v231 = vadd.f32 %v229, %v230
    %v232 = vrot.slane %v231, 1
    %v233 = vadd.f32 %v231, %v232
    %v234 = vmul.f32 %v227, 0.125
    %v235 = vmul.f32 %v233, 0.125
    %v236 = vmul.f32 %v216, %v216
    %v237 = vmul.f32 %v218, %v218
    %v238 = vrot.slane %v236, 4
    %v239 = vadd.f32 %v236, %v238
    %v240 = vrot.slane %v239, 2
    %v241 = vadd.f32 %v239, %v240
    %v242 = vrot.slane %v241, 1
    %v243 = vadd.f32 %v241, %v242
    %v244 = vrot.slane %v237, 4
    %v245 = vadd.f32 %v237, %v244
    %v246 = vrot.slane %v245, 2
    %v247 = vadd.f32 %v245, %v246
    %v248 = vrot.slane %v247, 1
    %v249 = vadd.f32 %v247, %v248
    %v250 = vmul.f32 %v243, 0.125
    %v251 = vmul.f32 %v249, 0.125
    %v252 = vmul.f32 %v234, %v234
    %v253 = vmul.f32 %v235, %v235
    %v254 = vsub.f32 %v250, %v252
    %v255 = vsub.f32 %v251, %v253
    %v256 = vmax.f32 %v254, 0.0
    %v257 = vmax.f32 %v255, 0.0
    %v258 = vadd.f32 %v256, 1e-05
    %v259 = vadd.f32 %v257, 1e-05
    %v260 = vrsqrt.pop %v258
    %v261 = vrsqrt.pop %v259
    %v262 = vld [vmem:[%s2] ss:$2 sm:$0x3]
    %s263 = scalar_lea.vmem %s2, 1
    %v264 = vld [vmem:[%s263] ss:$2 sm:$0x3]
    %v266 = vlaneseq
    %v267 = vshrl.u32 %v266, 7
    %v268 = vsub.s32 0, %v267
    %v269 = vrot.slane %v262, %v268
    %v270 = vlaneseq
    %v271 = vshrl.u32 %v270, 7
    %v272 = vsub.s32 1, %v271
    %v273 = vrot.slane %v262, %v272
    %v276 = vmul.f32 %v260, %v269
    %v277 = vmul.f32 %v261, %v273
    %v278 = vmul.f32 %v234, %v276
    %v279 = vmul.f32 %v235, %v277
    %v282 = vcombine.low %v278, %v279
    %v284 = vunpack.c.l.s4 1966171168
    %v285 = vunpack.c.0.s8 %v284
    %v286 = vlaneseq
    %v287 = vshrl.u32 %v286, 7
    %v288 = vsub.s32 %v285, %v287
    %v289 = vrot.slane %v282, %v288
    %v291 = vunpack.c.l.s4 1966171168
    %v292 = vunpack.c.0.s8 %v291
    %v293 = vlaneseq
    %v294 = vshrl.u32 %v293, 7
    %v295 = vsub.s32 %v292, %v294
    %v296 = vrot.slane %v289, %v295
    %v298 = vsub.f32 %v264, %v296
    %v299 = vlaneseq
    %v300 = vshrl.u32 %v299, 7
    %v301 = vsub.s32 0, %v300
    %v302 = vrot.slane %v276, %v301
    %v303 = vlaneseq
    %v304 = vshrl.u32 %v303, 7
    %v305 = vsub.s32 0, %v304
    %v306 = vrot.slane %v277, %v305
    %v307 = vmul.f32 %v216, %v302
    %v308 = vmul.f32 %v218, %v306
    %v310 = vlaneseq
    %v311 = vshrl.u32 %v310, 7
    %v312 = vsub.s32 0, %v311
    %v313 = vrot.slane %v298, %v312
    %v314 = vlaneseq
    %v315 = vshrl.u32 %v314, 7
    %v316 = vsub.s32 1, %v315
    %v317 = vrot.slane %v298, %v316
    %v320 = vadd.f32 %v307, %v313
    %v321 = vadd.f32 %v308, %v317
    %v322 = vmax.f32 %v320, 0.0
    %v323 = vmax.f32 %v321, 0.0
    %324 = vst [vmem:[#allocation2] sm:$0xff] %v322
    %325 = vst [vmem:[#allocation2 + $0x8] sm:$0xff] %v323
    // Predicated region
    $region14: #{tpu_custom_call.1} parent=1 // pred_check
      _
    $region15: #{tpu_custom_call.1} parent=1 // pred_check_branch
      %327 = sbr.rel (0) target = $region17
    $region16: #{tpu_custom_call.1} parent=1 // pred_region
      %s329 = ssub.s32 256, 256
      %330 = vsyncadd [#allocation3], %s329
      %s332 = sshll.u32 [#allocation2], 4
      %s333 = int_to_ptr.vmem [resolvable:$true] %s332
      %335 = dma.vmem_to_hbm [thread:$0]  %s333, 256, %s3, [#allocation3]
    $region17: #{tpu_custom_call.1} parent=1 // pred_fallthru
      _
    // Predicated region
    $region18: #{tpu_custom_call.1} parent=1 // pred_check
      _
    $region19: #{tpu_custom_call.1} parent=1 // pred_check_branch
      %337 = sbr.rel (0) target = $region21
    $region20: #{tpu_custom_call.1} parent=1 // pred_region
      %338 = dma.done [#allocation3], 256
    $region21: #{tpu_custom_call.1} parent=1 // pred_fallthru
      _
    %339 = vsyncpa [#allocation3], 1

</llo_original>
